<compile_context>
chip_gen: v7x
topology: tpu7x:2x2x1
jax: 0.10.0
libtpu: 0.0.40
codegen_flags: <defaults>
</compile_context>

<pallas_src>
import functools

import jax
import jax.numpy as jnp
from jax.experimental import pallas as pl
from jax.experimental.pallas import tpu as pltpu


def _triplet_kernel(count_ref, emb_ref, embt_ref, sqc_ref, sqr_ref,
                    labc_ref, labr_ref, out_ref):
    i = pl.program_id(0)
    tm = emb_ref.shape[0]

    n_valid = count_ref[0]                      # true batch size (int32 scalar, SMEM)

    # Gram slab on the MXU: (TM, Dp) x (Dp, Bp) -> (TM, Bp), f32 accumulation.
    g = jnp.dot(emb_ref[...], embt_ref[...], preferred_element_type=jnp.float32)
    bp = g.shape[1]

    sq_col = sqc_ref[...]                       # (TM, 1) f32  ||e_i||^2 for anchors
    sq_row = sqr_ref[...]                       # (1, Bp) f32  ||e_j||^2 for all rows

    # Squared euclidean distances, clamped at 0, then non-squared variant.
    d2 = jnp.maximum(sq_row - 2.0 * g + sq_col, 0.0)
    dist = jnp.where(d2 > 0.0, jnp.sqrt(d2), 0.0)

    labels_equal = labc_ref[...] == labr_ref[...]          # (TM, Bp) bool

    row_ids = i * tm + jax.lax.broadcasted_iota(jnp.int32, (tm, 1), 0)   # global anchor ids
    col_ids = jax.lax.broadcasted_iota(jnp.int32, (1, bp), 1)
    row_valid = row_ids < n_valid                          # (TM, 1)
    col_valid = col_ids < n_valid                          # (1, Bp)
    not_eye = row_ids != col_ids                           # (TM, Bp) off-diagonal

    # Hardest positive: max over same-label, off-diagonal, valid columns.
    pos_mask = jnp.logical_and(jnp.logical_and(labels_equal, not_eye), col_valid)
    hardest_pos = jnp.max(jnp.where(pos_mask, dist, 0.0), axis=1, keepdims=True)

    # Hardest negative: push positives / diagonal / padded columns up by the row max,
    # then take the min (matches the reference's dist + max_neg * (1 - mask_an)).
    max_neg = jnp.max(jnp.where(col_valid, dist, 0.0), axis=1, keepdims=True)
    push = jnp.logical_or(labels_equal, jnp.logical_not(col_valid))
    hardest_neg = jnp.min(jnp.where(push, dist + max_neg, dist), axis=1, keepdims=True)

    # Stable softplus: log1p(exp(x)) without f32 overflow for large gaps.
    x = hardest_pos - hardest_neg
    tl = jnp.maximum(x, 0.0) + jnp.log1p(jnp.exp(-jnp.abs(x)))
    out_ref[...] = jnp.where(row_valid, tl, 0.0)           # padded rows contribute 0


@functools.partial(jax.jit, static_argnames=("block_rows",))
def hard_soft_margin_triplet_loss(rep: jax.Array, labels: jax.Array,
                                  *, block_rows: int = 128) -> jax.Array:
    """rep: (B, D) float embeddings (bf16 preferred), labels: (B,) int labels -> scalar."""
    b, d = rep.shape
    tm = block_rows
    dp = max(128, ((d + 127) // 128) * 128)     # lane-pad feature dim (explicit zeros!)
    bp = ((b + tm - 1) // tm) * tm              # row-pad batch to a multiple of the tile

    emb = jnp.pad(rep, ((0, bp - b), (0, dp - d)))      # keep native dtype (bf16 -> fast MXU)
    emb_t = emb.T                                        # (Dp, Bp): contracted operand in (K, N)

    sq = jnp.sum(emb.astype(jnp.float32) ** 2, axis=1)   # exact f32 row norms
    sq_col = sq.reshape(bp, 1)
    sq_row = sq.reshape(1, bp)

    lab = jnp.pad(labels.astype(jnp.int32), (0, bp - b))
    lab_col = lab.reshape(bp, 1)
    lab_row = lab.reshape(1, bp)

    count = jnp.array([b], jnp.int32)

    itemsize = emb.dtype.itemsize
    vmem_est = (2 * tm * dp * itemsize            # double-buffered anchor tiles
                + 2 * dp * bp * itemsize          # resident transposed embeddings
                + 8 * tm * bp * 4                 # dist slab + live temporaries
                + (1 << 20))
    vmem_limit = int(min(64 * 1024 * 1024, max(32 * 1024 * 1024, vmem_est)))

    cost = pl.CostEstimate(
        flops=2 * bp * bp * dp,
        transcendentals=2 * bp,
        bytes_accessed=int(2 * bp * dp * itemsize + 4 * bp * 16 + 4 * bp),
    )

    grid = (bp // tm,)
    per_row = pl.pallas_call(
        _triplet_kernel,
        out_shape=jax.ShapeDtypeStruct((bp, 1), jnp.float32),
        grid=grid,
        in_specs=[
            pl.BlockSpec(memory_space=pltpu.MemorySpace.SMEM),            # count
            pl.BlockSpec((tm, dp), lambda i: (i, 0)),                     # anchor tile
            pl.BlockSpec((dp, bp), lambda i: (0, 0)),                     # full emb^T (resident)
            pl.BlockSpec((tm, 1), lambda i: (i, 0)),                      # anchor sq norms
            pl.BlockSpec((1, bp), lambda i: (0, 0)),                      # all sq norms (row)
            pl.BlockSpec((tm, 1), lambda i: (i, 0)),                      # anchor labels
            pl.BlockSpec((1, bp), lambda i: (0, 0)),                      # all labels (row)
        ],
        out_specs=pl.BlockSpec((tm, 1), lambda i: (i, 0)),                # per-anchor losses
        compiler_params=pltpu.CompilerParams(
            dimension_semantics=("parallel",),     # independent row blocks (megacore-friendly)
            vmem_limit_bytes=vmem_limit,
        ),
        cost_estimate=cost,
    )(count, emb, emb_t, sq_col, sq_row, lab_col, lab_row)

    return jnp.sum(per_row) / b                   # padded rows are exact zeros


def _reference_loss(rep, labels):
    """Pure-JAX reference mirroring the PyTorch module, for verification."""
    e = rep.astype(jnp.float32)
    dot = jnp.matmul(e, e.T, precision=jax.lax.Precision.HIGHEST)
    sq = jnp.diag(dot)
    dist = sq[None, :] - 2.0 * dot + sq[:, None]
    dist = jnp.maximum(dist, 0.0)
    mask = (dist == 0.0).astype(jnp.float32)
    dist = (1.0 - mask) * jnp.sqrt(dist + mask * 1e-16)

    eye = jnp.eye(rep.shape[0], dtype=bool)
    labels_equal = labels[None, :] == labels[:, None]
    mask_ap = (labels_equal & ~eye).astype(jnp.float32)
    hardest_pos = jnp.max(mask_ap * dist, axis=1, keepdims=True)
    mask_an = (~labels_equal).astype(jnp.float32)
    max_neg = jnp.max(dist, axis=1, keepdims=True)
    hardest_neg = jnp.min(dist + max_neg * (1.0 - mask_an), axis=1, keepdims=True)
    return jnp.mean(jnp.log1p(jnp.exp(hardest_pos - hardest_neg)))


if __name__ == "__main__":
    key = jax.random.PRNGKey(0)
    k_rep, k_lab = jax.random.split(key)

    B, D = 8, 32
    rep = jax.random.normal(k_rep, (B, D), dtype=jnp.float32).astype(jnp.bfloat16)
    labels = jax.random.randint(k_lab, (B,), 0, 3, dtype=jnp.int32)

    loss = hard_soft_margin_triplet_loss(rep, labels)
    loss = jax.block_until_ready(loss)

    ref = _reference_loss(rep, labels)
    assert jnp.allclose(loss, ref, rtol=1e-4, atol=1e-4), (loss, ref)

    print("KERNEL_OK")
</pallas_src>

<mosaic_0001>
module attributes {stable_mosaic.version = 11 : i64} {
  func.func @_triplet_kernel(%arg0: i32, %arg1: memref<1xi32, #tpu.memory_space<smem>>, %arg2: memref<128x128xbf16, #tpu.memory_space<vmem>>, %arg3: memref<128x128xbf16, #tpu.memory_space<vmem>>, %arg4: memref<128x1xf32, #tpu.memory_space<vmem>>, %arg5: memref<1x128xf32, #tpu.memory_space<vmem>>, %arg6: memref<128x1xi32, #tpu.memory_space<vmem>>, %arg7: memref<1x128xi32, #tpu.memory_space<vmem>>, %arg8: memref<128x1xf32, #tpu.memory_space<vmem>>) attributes {dimension_semantics = [#tpu.dimension_semantics<parallel>], iteration_bounds = array<i64: 1>, scalar_prefetch = 0 : i64, scratch_operands = 0 : i64, tpu.core_type = #tpu.core_type<tc>, window_params = [{transform_indices = @transform_0, window_bounds = array<i64: 1>}, {transform_indices = @transform_1, window_bounds = array<i64: 128, 128>}, {pipeline_mode = #tpu.pipeline_mode<synchronous>, transform_indices = @transform_2, window_bounds = array<i64: 128, 128>}, {transform_indices = @transform_3, window_bounds = array<i64: 128, 1>}, {pipeline_mode = #tpu.pipeline_mode<synchronous>, transform_indices = @transform_4, window_bounds = array<i64: 1, 128>}, {transform_indices = @transform_5, window_bounds = array<i64: 128, 1>}, {pipeline_mode = #tpu.pipeline_mode<synchronous>, transform_indices = @transform_6, window_bounds = array<i64: 1, 128>}, {transform_indices = @transform_7, window_bounds = array<i64: 128, 1>}]} {
    %c0 = arith.constant 0 : index
    %0 = memref.load %arg1[%c0] : memref<1xi32, #tpu.memory_space<smem>>
    %c0_0 = arith.constant 0 : index
    %c0_1 = arith.constant 0 : index
    %1 = vector.load %arg2[%c0_0, %c0_1] : memref<128x128xbf16, #tpu.memory_space<vmem>>, vector<128x128xbf16>
    %c0_2 = arith.constant 0 : index
    %c0_3 = arith.constant 0 : index
    %2 = vector.load %arg3[%c0_2, %c0_3] : memref<128x128xbf16, #tpu.memory_space<vmem>>, vector<128x128xbf16>
    %cst = arith.constant dense<0.000000e+00> : vector<128x128xf32>
    %3 = tpu.matmul %1, %2, %cst {dimension_numbers = #tpu.dot_dimension_numbers<[1], [0], [0], [1], [0, 0, 1, 1], [], []>} : vector<128x128xbf16>, vector<128x128xbf16>, vector<128x128xf32> -> vector<128x128xf32>
    %c0_4 = arith.constant 0 : index
    %c0_5 = arith.constant 0 : index
    %4 = vector.load %arg4[%c0_4, %c0_5] : memref<128x1xf32, #tpu.memory_space<vmem>>, vector<128x1xf32>
    %c0_6 = arith.constant 0 : index
    %c0_7 = arith.constant 0 : index
    %5 = vector.load %arg5[%c0_6, %c0_7] : memref<1x128xf32, #tpu.memory_space<vmem>>, vector<1x128xf32>
    %cst_8 = arith.constant 2.000000e+00 : f32
    %6 = vector.broadcast %cst_8 : f32 to vector<128x128xf32>
    %7 = arith.mulf %6, %3 : vector<128x128xf32>
    %8 = vector.broadcast %5 : vector<1x128xf32> to vector<128x128xf32>
    %9 = arith.subf %8, %7 : vector<128x128xf32>
    %10 = vector.broadcast %4 : vector<128x1xf32> to vector<128x128xf32>
    %11 = arith.addf %9, %10 : vector<128x128xf32>
    %cst_9 = arith.constant 0.000000e+00 : f32
    %12 = vector.broadcast %cst_9 : f32 to vector<128x128xf32>
    %13 = arith.maximumf %11, %12 : vector<128x128xf32>
    %cst_10 = arith.constant 0.000000e+00 : f32
    %14 = vector.broadcast %cst_10 : f32 to vector<128x128xf32>
    %15 = arith.cmpf ogt, %13, %14 : vector<128x128xf32>
    %16 = math.sqrt %13 : vector<128x128xf32>
    %cst_11 = arith.constant 0.000000e+00 : f32
    %17 = vector.broadcast %cst_11 : f32 to vector<128x128xf32>
    %18 = arith.select %15, %16, %17 : vector<128x128xi1>, vector<128x128xf32>
    %c0_12 = arith.constant 0 : index
    %c0_13 = arith.constant 0 : index
    %19 = vector.load %arg6[%c0_12, %c0_13] : memref<128x1xi32, #tpu.memory_space<vmem>>, vector<128x1xi32>
    %c0_14 = arith.constant 0 : index
    %c0_15 = arith.constant 0 : index
    %20 = vector.load %arg7[%c0_14, %c0_15] : memref<1x128xi32, #tpu.memory_space<vmem>>, vector<1x128xi32>
    %21 = vector.broadcast %19 : vector<128x1xi32> to vector<128x128xi32>
    %22 = vector.broadcast %20 : vector<1x128xi32> to vector<128x128xi32>
    %23 = arith.cmpi eq, %21, %22 : vector<128x128xi32>
    %c128_i32 = arith.constant 128 : i32
    %24 = arith.muli %arg0, %c128_i32 : i32
    %25 = tpu.iota {dimensions = array<i32: 0>} : vector<128x1xi32>
    %26 = vector.broadcast %24 : i32 to vector<128x1xi32>
    %27 = arith.addi %26, %25 : vector<128x1xi32>
    %28 = tpu.iota {dimensions = array<i32: 1>} : vector<1x128xi32>
    %29 = vector.broadcast %0 : i32 to vector<128x1xi32>
    %30 = arith.cmpi slt, %27, %29 : vector<128x1xi32>
    %31 = vector.broadcast %0 : i32 to vector<1x128xi32>
    %32 = arith.cmpi slt, %28, %31 : vector<1x128xi32>
    %33 = vector.broadcast %27 : vector<128x1xi32> to vector<128x128xi32>
    %34 = vector.broadcast %28 : vector<1x128xi32> to vector<128x128xi32>
    %35 = arith.cmpi ne, %33, %34 : vector<128x128xi32>
    %36 = arith.andi %23, %35 : vector<128x128xi1>
    %37 = vector.broadcast %32 : vector<1x128xi1> to vector<128x128xi1>
    %38 = arith.andi %36, %37 : vector<128x128xi1>
    %cst_16 = arith.constant 0.000000e+00 : f32
    %39 = vector.broadcast %cst_16 : f32 to vector<128x128xf32>
    %40 = arith.select %38, %18, %39 : vector<128x128xi1>, vector<128x128xf32>
    %cst_17 = arith.constant dense<0xFF800000> : vector<128xf32>
    %41 = vector.multi_reduction <maximumf>, %40, %cst_17 [1] : vector<128x128xf32> to vector<128xf32>
    %42 = vector.shape_cast %41 : vector<128xf32> to vector<128x1xf32>
    %cst_18 = arith.constant 0.000000e+00 : f32
    %43 = vector.shape_cast %32 : vector<1x128xi1> to vector<1x128xi1>
    %44 = vector.broadcast %43 : vector<1x128xi1> to vector<128x128xi1>
    %45 = vector.broadcast %cst_18 : f32 to vector<128x128xf32>
    %46 = arith.select %44, %18, %45 : vector<128x128xi1>, vector<128x128xf32>
    %cst_19 = arith.constant dense<0xFF800000> : vector<128xf32>
    %47 = vector.multi_reduction <maximumf>, %46, %cst_19 [1] : vector<128x128xf32> to vector<128xf32>
    %48 = vector.shape_cast %47 : vector<128xf32> to vector<128x1xf32>
    %cst_20 = arith.constant dense<true> : vector<1x128xi1>
    %49 = arith.xori %32, %cst_20 : vector<1x128xi1>
    %50 = vector.broadcast %49 : vector<1x128xi1> to vector<128x128xi1>
    %51 = arith.ori %23, %50 : vector<128x128xi1>
    %52 = vector.broadcast %48 : vector<128x1xf32> to vector<128x128xf32>
    %53 = arith.addf %18, %52 : vector<128x128xf32>
    %54 = arith.select %51, %53, %18 : vector<128x128xi1>, vector<128x128xf32>
    %cst_21 = arith.constant dense<0x7F800000> : vector<128xf32>
    %55 = vector.multi_reduction <minimumf>, %54, %cst_21 [1] : vector<128x128xf32> to vector<128xf32>
    %56 = vector.shape_cast %55 : vector<128xf32> to vector<128x1xf32>
    %57 = arith.subf %42, %56 : vector<128x1xf32>
    %cst_22 = arith.constant 0.000000e+00 : f32
    %58 = vector.broadcast %cst_22 : f32 to vector<128x1xf32>
    %59 = arith.maximumf %57, %58 : vector<128x1xf32>
    %60 = math.absf %57 : vector<128x1xf32>
    %cst_23 = arith.constant 0.000000e+00 : f32
    %61 = vector.broadcast %cst_23 : f32 to vector<128x1xf32>
    %62 = arith.subf %61, %60 : vector<128x1xf32>
    %63 = math.exp %62 : vector<128x1xf32>
    %64 = math.log1p %63 : vector<128x1xf32>
    %65 = arith.addf %59, %64 : vector<128x1xf32>
    %cst_24 = arith.constant 0.000000e+00 : f32
    %66 = vector.broadcast %cst_24 : f32 to vector<128x1xf32>
    %67 = arith.select %30, %65, %66 : vector<128x1xi1>, vector<128x1xf32>
    %c0_25 = arith.constant 0 : index
    %c0_26 = arith.constant 0 : index
    %68 = vector.load %arg8[%c0_25, %c0_26] : memref<128x1xf32, #tpu.memory_space<vmem>>, vector<128x1xf32>
    tpu.vector_store %arg8[%c0_25, %c0_26], %67 {strides = array<i32>} : memref<128x1xf32, #tpu.memory_space<vmem>>, vector<128x1xf32>,
    return
  }
  func.func @transform_0(%arg0: i32) -> i32 {
    %c0_i32 = arith.constant 0 : i32
    %c0_i32_0 = arith.constant 0 : i32
    return %c0_i32 : i32
  }
  func.func @transform_1(%arg0: i32) -> (i32, i32) {
    %c0_i32 = arith.constant 0 : i32
    %c0_i32_0 = arith.constant 0 : i32
    return %arg0, %c0_i32 : i32, i32
  }
  func.func @transform_2(%arg0: i32) -> (i32, i32) {
    %c0_i32 = arith.constant 0 : i32
    %c0_i32_0 = arith.constant 0 : i32
    %c0_i32_1 = arith.constant 0 : i32
    return %c0_i32, %c0_i32_0 : i32, i32
  }
  func.func @transform_3(%arg0: i32) -> (i32, i32) {
    %c0_i32 = arith.constant 0 : i32
    %c0_i32_0 = arith.constant 0 : i32
    return %arg0, %c0_i32 : i32, i32
  }
  func.func @transform_4(%arg0: i32) -> (i32, i32) {
    %c0_i32 = arith.constant 0 : i32
    %c0_i32_0 = arith.constant 0 : i32
    %c0_i32_1 = arith.constant 0 : i32
    return %c0_i32, %c0_i32_0 : i32, i32
  }
  func.func @transform_5(%arg0: i32) -> (i32, i32) {
    %c0_i32 = arith.constant 0 : i32
    %c0_i32_0 = arith.constant 0 : i32
    return %arg0, %c0_i32 : i32, i32
  }
  func.func @transform_6(%arg0: i32) -> (i32, i32) {
    %c0_i32 = arith.constant 0 : i32
    %c0_i32_0 = arith.constant 0 : i32
    %c0_i32_1 = arith.constant 0 : i32
    return %c0_i32, %c0_i32_0 : i32, i32
  }
  func.func @transform_7(%arg0: i32) -> (i32, i32) {
    %c0_i32 = arith.constant 0 : i32
    %c0_i32_0 = arith.constant 0 : i32
    return %arg0, %c0_i32 : i32, i32
  }
}

</mosaic_0001>

<llo_original>
// kernel: hard_soft_margin_triplet_loss.1
$region0: #{hard_soft_margin_triplet_loss.1}
  #allocation0 [shape = 'u32[]', space=smem, size = 0x4, offset = 0x4, fixed_abs, tag = 'smem constant byte address 0x4 - core index']
  #allocation1 [shape = 'u32[144,128]{1,0:T(1,128)}', space=vmem, size = 0x12000, scoped, tag = 'internal scratch']
  #allocation2 [shape = 's32[1]{0:T(128)S(6)}', space=smem, size = 0x200, scoped, tag = 'scoped memory for hard_soft_margin_triplet_loss.1']
  %s0 = inlined_call_operand.<no memory space> [shape: s32[1], index: 0, kind: input, shape index: {}]
  %s1 = inlined_call_operand.vmem [shape: bf16[128,128], index: 1, kind: input, shape index: {}]
  %s2 = inlined_call_operand.vmem [shape: bf16[128,128], index: 2, kind: input, shape index: {}]
  %s3 = inlined_call_operand.vmem [shape: f32[128,1], index: 3, kind: input, shape index: {}]
  %s4 = inlined_call_operand.vmem [shape: f32[1,128], index: 4, kind: input, shape index: {}]
  %s5 = inlined_call_operand.vmem [shape: s32[128,1], index: 5, kind: input, shape index: {}]
  %s6 = inlined_call_operand.vmem [shape: s32[1,128], index: 6, kind: input, shape index: {}]
  %s7 = inlined_call_operand.vmem [shape: f32[128,1], index: 7, kind: output, shape index: {}]
  %s8 = sld [smem:[#allocation0]]
  $region38: #{hard_soft_margin_triplet_loss.1} parent=0
    _
  %s10 = ssub.s32 1, %s8
  %s11 = scalar_select 0, %s10, %s8
  %12 = sst [smem:[#allocation2]] %s0
  // Predicated region
  $region2: #{hard_soft_margin_triplet_loss.1} parent=0 // pred_check
    _
  $region3: #{hard_soft_margin_triplet_loss.1} parent=0 // pred_check_branch
    %14 = sbr.rel (0) target = $region5
  $region4: #{hard_soft_margin_triplet_loss.1} parent=0 // pred_region
    _
  $region5: #{hard_soft_margin_triplet_loss.1} parent=0 // pred_fallthru
    _
  // Predicated region
  $region6: #{hard_soft_margin_triplet_loss.1} parent=0 // pred_check
    _
  $region7: #{hard_soft_margin_triplet_loss.1} parent=0 // pred_check_branch
    %16 = sbr.rel (0) target = $region9
  $region8: #{hard_soft_margin_triplet_loss.1} parent=0 // pred_region
    _
  $region9: #{hard_soft_margin_triplet_loss.1} parent=0 // pred_fallthru
    _
  // Predicated region
  $region10: #{hard_soft_margin_triplet_loss.1} parent=0 // pred_check
    _
  $region11: #{hard_soft_margin_triplet_loss.1} parent=0 // pred_check_branch
    %18 = sbr.rel (0) target = $region13
  $region12: #{hard_soft_margin_triplet_loss.1} parent=0 // pred_region
    _
  $region13: #{hard_soft_margin_triplet_loss.1} parent=0 // pred_fallthru
    _
  // Predicated region
  $region14: #{hard_soft_margin_triplet_loss.1} parent=0 // pred_check
    _
  $region15: #{hard_soft_margin_triplet_loss.1} parent=0 // pred_check_branch
    %20 = sbr.rel (0) target = $region17
  $region16: #{hard_soft_margin_triplet_loss.1} parent=0 // pred_region
    _
  $region17: #{hard_soft_margin_triplet_loss.1} parent=0 // pred_fallthru
    _
  // Predicated region
  $region18: #{hard_soft_margin_triplet_loss.1} parent=0 // pred_check
    _
  $region19: #{hard_soft_margin_triplet_loss.1} parent=0 // pred_check_branch
    %22 = sbr.rel (0) target = $region21
  $region20: #{hard_soft_margin_triplet_loss.1} parent=0 // pred_region
    _
  $region21: #{hard_soft_margin_triplet_loss.1} parent=0 // pred_fallthru
    _
  // Predicated region
  $region22: #{hard_soft_margin_triplet_loss.1} parent=0 // pred_check
    _
  $region23: #{hard_soft_margin_triplet_loss.1} parent=0 // pred_check_branch
    %24 = sbr.rel (0) target = $region25
  $region24: #{hard_soft_margin_triplet_loss.1} parent=0 // pred_region
    _
  $region25: #{hard_soft_margin_triplet_loss.1} parent=0 // pred_fallthru
    _
  // Predicated region
  $region26: #{hard_soft_margin_triplet_loss.1} parent=0 // pred_check
    _
  $region27: #{hard_soft_margin_triplet_loss.1} parent=0 // pred_check_branch
    %26 = sbr.rel (0) target = $region29
  $region28: #{hard_soft_margin_triplet_loss.1} parent=0 // pred_region
    _
  $region29: #{hard_soft_margin_triplet_loss.1} parent=0 // pred_fallthru
    _
  %s28 = sld [smem:[#allocation2]]
  %v29 = vld [vmem:[%s1] sm:$0xf]
  %v30 = vld [vmem:[%s1 + $0x4] sm:$0xf]
  %v31 = vld [vmem:[%s1 + $0x8] sm:$0xf]
  %v32 = vld [vmem:[%s1 + $0xc] sm:$0xf]
  %v33 = vld [vmem:[%s1 + $0x10] sm:$0xf]
  %v34 = vld [vmem:[%s1 + $0x14] sm:$0xf]
  %v35 = vld [vmem:[%s1 + $0x18] sm:$0xf]
  %v36 = vld [vmem:[%s1 + $0x1c] sm:$0xf]
  %v37 = vld [vmem:[%s1 + $0x20] sm:$0xf]
  %v38 = vld [vmem:[%s1 + $0x24] sm:$0xf]
  %v39 = vld [vmem:[%s1 + $0x28] sm:$0xf]
  %v40 = vld [vmem:[%s1 + $0x2c] sm:$0xf]
  %v41 = vld [vmem:[%s1 + $0x30] sm:$0xf]
  %v42 = vld [vmem:[%s1 + $0x34] sm:$0xf]
  %v43 = vld [vmem:[%s1 + $0x38] sm:$0xf]
  %v44 = vld [vmem:[%s1 + $0x3c] sm:$0xf]
  %v45 = vld [vmem:[%s2] sm:$0xf]
  %v46 = vld [vmem:[%s2 + $0x4] sm:$0xf]
  %v47 = vld [vmem:[%s2 + $0x8] sm:$0xf]
  %v48 = vld [vmem:[%s2 + $0xc] sm:$0xf]
  %v49 = vld [vmem:[%s2 + $0x10] sm:$0xf]
  %v50 = vld [vmem:[%s2 + $0x14] sm:$0xf]
  %v51 = vld [vmem:[%s2 + $0x18] sm:$0xf]
  %v52 = vld [vmem:[%s2 + $0x1c] sm:$0xf]
  %v53 = vld [vmem:[%s2 + $0x20] sm:$0xf]
  %v54 = vld [vmem:[%s2 + $0x24] sm:$0xf]
  %v55 = vld [vmem:[%s2 + $0x28] sm:$0xf]
  %v56 = vld [vmem:[%s2 + $0x2c] sm:$0xf]
  %v57 = vld [vmem:[%s2 + $0x30] sm:$0xf]
  %v58 = vld [vmem:[%s2 + $0x34] sm:$0xf]
  %v59 = vld [vmem:[%s2 + $0x38] sm:$0xf]
  %v60 = vld [vmem:[%s2 + $0x3c] sm:$0xf]
  %v77 = vunpack.c.l.b16 %v29
  %v78 = vunpack.c.l.b16 %v30
  %v79 = vunpack.c.l.b16 %v31
  %v80 = vunpack.c.l.b16 %v32
  %v81 = vunpack.c.l.b16 %v33
  %v82 = vunpack.c.l.b16 %v34
  %v83 = vunpack.c.l.b16 %v35
  %v84 = vunpack.c.l.b16 %v36
  %v85 = vunpack.c.l.b16 %v37
  %v86 = vunpack.c.l.b16 %v38
  %v87 = vunpack.c.l.b16 %v39
  %v88 = vunpack.c.l.b16 %v40
  %v89 = vunpack.c.l.b16 %v41
  %v90 = vunpack.c.l.b16 %v42
  %v91 = vunpack.c.l.b16 %v43
  %v92 = vunpack.c.l.b16 %v44
  %v93 = vpack.c.b16 %v78, %v77
  %v94 = vpack.c.b16 %v80, %v79
  %v95 = vpack.c.b16 %v82, %v81
  %v96 = vpack.c.b16 %v84, %v83
  %v97 = vpack.c.b16 %v86, %v85
  %v98 = vpack.c.b16 %v88, %v87
  %v99 = vpack.c.b16 %v90, %v89
  %v100 = vpack.c.b16 %v92, %v91
  %v125 = vunpack.c.l.b16 %v45
  %v126 = vunpack.c.l.b16 %v46
  %v127 = vunpack.c.l.b16 %v47
  %v128 = vunpack.c.l.b16 %v48
  %v129 = vunpack.c.l.b16 %v49
  %v130 = vunpack.c.l.b16 %v50
  %v131 = vunpack.c.l.b16 %v51
  %v132 = vunpack.c.l.b16 %v52
  %v133 = vunpack.c.l.b16 %v53
  %v134 = vunpack.c.l.b16 %v54
  %v135 = vunpack.c.l.b16 %v55
  %v136 = vunpack.c.l.b16 %v56
  %v137 = vunpack.c.l.b16 %v57
  %v138 = vunpack.c.l.b16 %v58
  %v139 = vunpack.c.l.b16 %v59
  %v140 = vunpack.c.l.b16 %v60
  %v141 = vpack.c.b16 %v126, %v125
  %v142 = vpack.c.b16 %v128, %v127
  %v143 = vpack.c.b16 %v130, %v129
  %v144 = vpack.c.b16 %v132, %v131
  %v145 = vpack.c.b16 %v134, %v133
  %v146 = vpack.c.b16 %v136, %v135
  %v147 = vpack.c.b16 %v138, %v137
  %v148 = vpack.c.b16 %v140, %v139
  %157 = vmatprep.subr.bf16.mxu0 0
  %158 = vmatpush1.bf16.msra.mxu0 %v141
  %159 = vmatprep.subr.bf16.mxu0 0
  %160 = vmatpush1.bf16.msra.mxu0 %v142
  %161 = vmatprep.subr.bf16.mxu0 0
  %162 = vmatpush1.bf16.msra.mxu0 %v143
  %163 = vmatprep.subr.bf16.mxu0 0
  %164 = vmatpush1.bf16.msra.mxu0 %v144
  %165 = vmatprep.subr.bf16.mxu0 0
  %166 = vmatpush1.bf16.msra.mxu0 %v145
  %167 = vmatprep.subr.bf16.mxu0 0
  %168 = vmatpush1.bf16.msra.mxu0 %v146
  %169 = vmatprep.subr.bf16.mxu0 0
  %170 = vmatpush1.bf16.msra.mxu0 %v147
  %171 = vmatprep.subr.bf16.mxu0 0
  %172 = vmatpush1.bf16.msra.mxu0 %v148
  %173 = vmatprep.subr.bf16.mxu0 0
  %174 = vmatpush1.bf16.msra.mxu0 0
  %175 = vmatprep.subr.bf16.mxu0 0
  %176 = vmatpush1.bf16.msra.mxu0 0
  %177 = vmatprep.subr.bf16.mxu0 0
  %178 = vmatpush1.bf16.msra.mxu0 0
  %179 = vmatprep.subr.bf16.mxu0 0
  %180 = vmatpush1.bf16.msra.mxu0 0
  %181 = vmatprep.subr.bf16.mxu0 0
  %182 = vmatpush1.bf16.msra.mxu0 0
  %183 = vmatprep.subr.bf16.mxu0 0
  %184 = vmatpush1.bf16.msra.mxu0 0
  %185 = vmatprep.subr.bf16.mxu0 0
  %186 = vmatpush1.bf16.msra.mxu0 0
  %187 = vmatprep.subr.bf16.mxu0 0
  %188 = vmatpush1.bf16.msra.mxu0 0
  %189 = vmatprep.mubr.bf16.mxu0 0
  %190 = vmatmul.mubr.bf16.gmra.mrb[0].mxu0 %v93
  %v191 = vpop.f32.mrb[0].mxu0
  %v192 = vadd.f32 0.0, %v191
  %v193 = vpop.f32.mrb[0].mxu0
  %v194 = vpop.f32.mrb[0].mxu0
  %v195 = vadd.f32 0.0, %v194
  %v196 = vpop.f32.mrb[0].mxu0
  %197 = vmatprep.mubr.bf16.mxu0 0
  %198 = vmatmul.mubr.bf16.gmra.mrb[0].mxu0 %v94
  %v199 = vpop.f32.mrb[0].mxu0
  %v200 = vadd.f32 0.0, %v199
  %v201 = vpop.f32.mrb[0].mxu0
  %v202 = vpop.f32.mrb[0].mxu0
  %v203 = vadd.f32 0.0, %v202
  %v204 = vpop.f32.mrb[0].mxu0
  %205 = vmatprep.mubr.bf16.mxu0 0
  %206 = vmatmul.mubr.bf16.gmra.mrb[0].mxu0 %v95
  %v207 = vpop.f32.mrb[0].mxu0
  %v208 = vadd.f32 0.0, %v207
  %v209 = vpop.f32.mrb[0].mxu0
  %v210 = vpop.f32.mrb[0].mxu0
  %v211 = vadd.f32 0.0, %v210
  %v212 = vpop.f32.mrb[0].mxu0
  %213 = vmatprep.mubr.bf16.mxu0 0
  %214 = vmatmul.mubr.bf16.gmra.mrb[0].mxu0 %v96
  %v215 = vpop.f32.mrb[0].mxu0
  %v216 = vadd.f32 0.0, %v215
  %v217 = vpop.f32.mrb[0].mxu0
  %v218 = vpop.f32.mrb[0].mxu0
  %v219 = vadd.f32 0.0, %v218
  %v220 = vpop.f32.mrb[0].mxu0
  %221 = vmatprep.mubr.bf16.mxu0 0
  %222 = vmatmul.mubr.bf16.gmra.mrb[0].mxu0 %v97
  %v223 = vpop.f32.mrb[0].mxu0
  %v224 = vadd.f32 0.0, %v223
  %v225 = vpop.f32.mrb[0].mxu0
  %v226 = vpop.f32.mrb[0].mxu0
  %v227 = vadd.f32 0.0, %v226
  %v228 = vpop.f32.mrb[0].mxu0
  %229 = vmatprep.mubr.bf16.mxu0 0
  %230 = vmatmul.mubr.bf16.gmra.mrb[0].mxu0 %v98
  %v231 = vpop.f32.mrb[0].mxu0
  %v232 = vadd.f32 0.0, %v231
  %v233 = vpop.f32.mrb[0].mxu0
  %v234 = vpop.f32.mrb[0].mxu0
  %v235 = vadd.f32 0.0, %v234
  %v236 = vpop.f32.mrb[0].mxu0
  %237 = vmatprep.mubr.bf16.mxu0 0
  %238 = vmatmul.mubr.bf16.gmra.mrb[0].mxu0 %v99
  %v239 = vpop.f32.mrb[0].mxu0
  %v240 = vadd.f32 0.0, %v239
  %v241 = vpop.f32.mrb[0].mxu0
  %v242 = vpop.f32.mrb[0].mxu0
  %v243 = vadd.f32 0.0, %v242
  %v244 = vpop.f32.mrb[0].mxu0
  %245 = vmatprep.mubr.bf16.mxu0 0
  %246 = vmatmul.mubr.bf16.gmra.mrb[0].mxu0 %v100
  %v247 = vpop.f32.mrb[0].mxu0
  %v248 = vadd.f32 0.0, %v247
  %v249 = vpop.f32.mrb[0].mxu0
  %v250 = vpop.f32.mrb[0].mxu0
  %v251 = vadd.f32 0.0, %v250
  %v252 = vpop.f32.mrb[0].mxu0
  %253 = vdwg.mxu0
  %v254 = vld [vmem:[%s3] sm:$0xff]
  %v255 = vld [vmem:[%s3 + $0x8] sm:$0xff]
  %v256 = vld [vmem:[%s3 + $0x10] sm:$0xff]
  %v257 = vld [vmem:[%s3 + $0x18] sm:$0xff]
  %v258 = vld [vmem:[%s3 + $0x20] sm:$0xff]
  %v259 = vld [vmem:[%s3 + $0x28] sm:$0xff]
  %v260 = vld [vmem:[%s3 + $0x30] sm:$0xff]
  %v261 = vld [vmem:[%s3 + $0x38] sm:$0xff]
  %v262 = vld [vmem:[%s3 + $0x40] sm:$0xff]
  %v263 = vld [vmem:[%s3 + $0x48] sm:$0xff]
  %v264 = vld [vmem:[%s3 + $0x50] sm:$0xff]
  %v265 = vld [vmem:[%s3 + $0x58] sm:$0xff]
  %v266 = vld [vmem:[%s3 + $0x60] sm:$0xff]
  %v267 = vld [vmem:[%s3 + $0x68] sm:$0xff]
  %v268 = vld [vmem:[%s3 + $0x70] sm:$0xff]
  %v269 = vld [vmem:[%s3 + $0x78] sm:$0xff]
  %v270 = vld [vmem:[%s4] sm:$0x1]
  %v271 = vmul.f32 %v192, 2.0
  %v272 = vmul.f32 %v195, 2.0
  %v273 = vmul.f32 %v200, 2.0
  %v274 = vmul.f32 %v203, 2.0
  %v275 = vmul.f32 %v208, 2.0
  %v276 = vmul.f32 %v211, 2.0
  %v277 = vmul.f32 %v216, 2.0
  %v278 = vmul.f32 %v219, 2.0
  %v279 = vmul.f32 %v224, 2.0
  %v280 = vmul.f32 %v227, 2.0
  %v281 = vmul.f32 %v232, 2.0
  %v282 = vmul.f32 %v235, 2.0
  %v283 = vmul.f32 %v240, 2.0
  %v284 = vmul.f32 %v243, 2.0
  %v285 = vmul.f32 %v248, 2.0
  %v286 = vmul.f32 %v251, 2.0
  %v288 = vlaneseq
  %v289 = vshrl.u32 %v288, 7
  %v290 = vsub.s32 0, %v289
  %v291 = vrot.slane %v270, %v290
  %v293 = vsub.f32 %v291, %v271
  %v294 = vsub.f32 %v291, %v272
  %v295 = vsub.f32 %v291, %v273
  %v296 = vsub.f32 %v291, %v274
  %v297 = vsub.f32 %v291, %v275
  %v298 = vsub.f32 %v291, %v276
  %v299 = vsub.f32 %v291, %v277
  %v300 = vsub.f32 %v291, %v278
  %v301 = vsub.f32 %v291, %v279
  %v302 = vsub.f32 %v291, %v280
  %v303 = vsub.f32 %v291, %v281
  %v304 = vsub.f32 %v291, %v282
  %v305 = vsub.f32 %v291, %v283
  %v306 = vsub.f32 %v291, %v284
  %v307 = vsub.f32 %v291, %v285
  %v308 = vsub.f32 %v291, %v286
  %310 = vset.pattern.permute.xlu0 0
  %311 = vperm.xlu0 %310, %v254
  %v312 = vpop.permute.xlu0 %311
  %315 = vset.pattern.permute.xlu0 0
  %316 = vperm.xlu0 %315, %v255
  %v317 = vpop.permute.xlu0 %316
  %320 = vset.pattern.permute.xlu0 0
  %321 = vperm.xlu0 %320, %v256
  %v322 = vpop.permute.xlu0 %321
  %325 = vset.pattern.permute.xlu0 0
  %326 = vperm.xlu0 %325, %v257
  %v327 = vpop.permute.xlu0 %326
  %330 = vset.pattern.permute.xlu0 0
  %331 = vperm.xlu0 %330, %v258
  %v332 = vpop.permute.xlu0 %331
  %335 = vset.pattern.permute.xlu0 0
  %336 = vperm.xlu0 %335, %v259
  %v337 = vpop.permute.xlu0 %336
  %340 = vset.pattern.permute.xlu0 0
  %341 = vperm.xlu0 %340, %v260
  %v342 = vpop.permute.xlu0 %341
  %345 = vset.pattern.permute.xlu0 0
  %346 = vperm.xlu0 %345, %v261
  %v347 = vpop.permute.xlu0 %346
  %350 = vset.pattern.permute.xlu0 0
  %351 = vperm.xlu0 %350, %v262
  %v352 = vpop.permute.xlu0 %351
  %355 = vset.pattern.permute.xlu0 0
  %356 = vperm.xlu0 %355, %v263
  %v357 = vpop.permute.xlu0 %356
  %360 = vset.pattern.permute.xlu0 0
  %361 = vperm.xlu0 %360, %v264
  %v362 = vpop.permute.xlu0 %361
  %365 = vset.pattern.permute.xlu0 0
  %366 = vperm.xlu0 %365, %v265
  %v367 = vpop.permute.xlu0 %366
  %370 = vset.pattern.permute.xlu0 0
  %371 = vperm.xlu0 %370, %v266
  %v372 = vpop.permute.xlu0 %371
  %375 = vset.pattern.permute.xlu0 0
  %376 = vperm.xlu0 %375, %v267
  %v377 = vpop.permute.xlu0 %376
  %380 = vset.pattern.permute.xlu0 0
  %381 = vperm.xlu0 %380, %v268
  %v382 = vpop.permute.xlu0 %381
  %385 = vset.pattern.permute.xlu0 0
  %386 = vperm.xlu0 %385, %v269
  %v387 = vpop.permute.xlu0 %386
  %v389 = vadd.f32 %v293, %v312
  %v390 = vadd.f32 %v294, %v317
  %v391 = vadd.f32 %v295, %v322
  %v392 = vadd.f32 %v296, %v327
  %v393 = vadd.f32 %v297, %v332
  %v394 = vadd.f32 %v298, %v337
  %v395 = vadd.f32 %v299, %v342
  %v396 = vadd.f32 %v300, %v347
  %v397 = vadd.f32 %v301, %v352
  %v398 = vadd.f32 %v302, %v357
  %v399 = vadd.f32 %v303, %v362
  %v400 = vadd.f32 %v304, %v367
  %v401 = vadd.f32 %v305, %v372
  %v402 = vadd.f32 %v306, %v377
  %v403 = vadd.f32 %v307, %v382
  %v404 = vadd.f32 %v308, %v387
  %v405 = vmax.f32 %v389, 0.0
  %v406 = vmax.f32 %v390, 0.0
  %v407 = vmax.f32 %v391, 0.0
  %v408 = vmax.f32 %v392, 0.0
  %v409 = vmax.f32 %v393, 0.0
  %v410 = vmax.f32 %v394, 0.0
  %v411 = vmax.f32 %v395, 0.0
  %v412 = vmax.f32 %v396, 0.0
  %v413 = vmax.f32 %v397, 0.0
  %v414 = vmax.f32 %v398, 0.0
  %v415 = vmax.f32 %v399, 0.0
  %v416 = vmax.f32 %v400, 0.0
  %v417 = vmax.f32 %v401, 0.0
  %v418 = vmax.f32 %v402, 0.0
  %v419 = vmax.f32 %v403, 0.0
  %v420 = vmax.f32 %v404, 0.0
  %vm421 = vcmp.gt.f32.partialorder %v405, 0.0
  %vm422 = vcmp.gt.f32.partialorder %v406, 0.0
  %vm423 = vcmp.gt.f32.partialorder %v407, 0.0
  %vm424 = vcmp.gt.f32.partialorder %v408, 0.0
  %vm425 = vcmp.gt.f32.partialorder %v409, 0.0
  %vm426 = vcmp.gt.f32.partialorder %v410, 0.0
  %vm427 = vcmp.gt.f32.partialorder %v411, 0.0
  %vm428 = vcmp.gt.f32.partialorder %v412, 0.0
  %vm429 = vcmp.gt.f32.partialorder %v413, 0.0
  %vm430 = vcmp.gt.f32.partialorder %v414, 0.0
  %vm431 = vcmp.gt.f32.partialorder %v415, 0.0
  %vm432 = vcmp.gt.f32.partialorder %v416, 0.0
  %vm433 = vcmp.gt.f32.partialorder %v417, 0.0
  %vm434 = vcmp.gt.f32.partialorder %v418, 0.0
  %vm435 = vcmp.gt.f32.partialorder %v419, 0.0
  %vm436 = vcmp.gt.f32.partialorder %v420, 0.0
  %v437 = vrsqrt.pop %v405
  %v438 = vmul.f32 %v405, %v437
  %vm439 = vcmp.eq.f32.partialorder %v405, inf
  %v440 = vsel %vm439, %v405, %v438
  %vm441 = vcmp.eq.f32.partialorder %v405, 0.0
  %v442 = vand.u32 %v405, 2147483648
  %v443 = vsel %vm441, %v442, %v440
  %v444 = vrsqrt.pop %v406
  %v445 = vmul.f32 %v406, %v444
  %vm446 = vcmp.eq.f32.partialorder %v406, inf
  %v447 = vsel %vm446, %v406, %v445
  %vm448 = vcmp.eq.f32.partialorder %v406, 0.0
  %v449 = vand.u32 %v406, 2147483648
  %v450 = vsel %vm448, %v449, %v447
  %v451 = vrsqrt.pop %v407
  %v452 = vmul.f32 %v407, %v451
  %vm453 = vcmp.eq.f32.partialorder %v407, inf
  %v454 = vsel %vm453, %v407, %v452
  %vm455 = vcmp.eq.f32.partialorder %v407, 0.0
  %v456 = vand.u32 %v407, 2147483648
  %v457 = vsel %vm455, %v456, %v454
  %v458 = vrsqrt.pop %v408
  %v459 = vmul.f32 %v408, %v458
  %vm460 = vcmp.eq.f32.partialorder %v408, inf
  %v461 = vsel %vm460, %v408, %v459
  %vm462 = vcmp.eq.f32.partialorder %v408, 0.0
  %v463 = vand.u32 %v408, 2147483648
  %v464 = vsel %vm462, %v463, %v461
  %v465 = vrsqrt.pop %v409
  %v466 = vmul.f32 %v409, %v465
  %vm467 = vcmp.eq.f32.partialorder %v409, inf
  %v468 = vsel %vm467, %v409, %v466
  %vm469 = vcmp.eq.f32.partialorder %v409, 0.0
  %v470 = vand.u32 %v409, 2147483648
  %v471 = vsel %vm469, %v470, %v468
  %v472 = vrsqrt.pop %v410
  %v473 = vmul.f32 %v410, %v472
  %vm474 = vcmp.eq.f32.partialorder %v410, inf
  %v475 = vsel %vm474, %v410, %v473
  %vm476 = vcmp.eq.f32.partialorder %v410, 0.0
  %v477 = vand.u32 %v410, 2147483648
  %v478 = vsel %vm476, %v477, %v475
  %v479 = vrsqrt.pop %v411
  %v480 = vmul.f32 %v411, %v479
  %vm481 = vcmp.eq.f32.partialorder %v411, inf
  %v482 = vsel %vm481, %v411, %v480
  %vm483 = vcmp.eq.f32.partialorder %v411, 0.0
  %v484 = vand.u32 %v411, 2147483648
  %v485 = vsel %vm483, %v484, %v482
  %v486 = vrsqrt.pop %v412
  %v487 = vmul.f32 %v412, %v486
  %vm488 = vcmp.eq.f32.partialorder %v412, inf
  %v489 = vsel %vm488, %v412, %v487
  %vm490 = vcmp.eq.f32.partialorder %v412, 0.0
  %v491 = vand.u32 %v412, 2147483648
  %v492 = vsel %vm490, %v491, %v489
  %v493 = vrsqrt.pop %v413
  %v494 = vmul.f32 %v413, %v493
  %vm495 = vcmp.eq.f32.partialorder %v413, inf
  %v496 = vsel %vm495, %v413, %v494
  %vm497 = vcmp.eq.f32.partialorder %v413, 0.0
  %v498 = vand.u32 %v413, 2147483648
  %v499 = vsel %vm497, %v498, %v496
  %v500 = vrsqrt.pop %v414
  %v501 = vmul.f32 %v414, %v500
  %vm502 = vcmp.eq.f32.partialorder %v414, inf
  %v503 = vsel %vm502, %v414, %v501
  %vm504 = vcmp.eq.f32.partialorder %v414, 0.0
  %v505 = vand.u32 %v414, 2147483648
  %v506 = vsel %vm504, %v505, %v503
  %v507 = vrsqrt.pop %v415
  %v508 = vmul.f32 %v415, %v507
  %vm509 = vcmp.eq.f32.partialorder %v415, inf
  %v510 = vsel %vm509, %v415, %v508
  %vm511 = vcmp.eq.f32.partialorder %v415, 0.0
  %v512 = vand.u32 %v415, 2147483648
  %v513 = vsel %vm511, %v512, %v510
  %v514 = vrsqrt.pop %v416
  %v515 = vmul.f32 %v416, %v514
  %vm516 = vcmp.eq.f32.partialorder %v416, inf
  %v517 = vsel %vm516, %v416, %v515
  %vm518 = vcmp.eq.f32.partialorder %v416, 0.0
  %v519 = vand.u32 %v416, 2147483648
  %v520 = vsel %vm518, %v519, %v517
  %v521 = vrsqrt.pop %v417
  %v522 = vmul.f32 %v417, %v521
  %vm523 = vcmp.eq.f32.partialorder %v417, inf
  %v524 = vsel %vm523, %v417, %v522
  %vm525 = vcmp.eq.f32.partialorder %v417, 0.0
  %v526 = vand.u32 %v417, 2147483648
  %v527 = vsel %vm525, %v526, %v524
  %v528 = vrsqrt.pop %v418
  %v529 = vmul.f32 %v418, %v528
  %vm530 = vcmp.eq.f32.partialorder %v418, inf
  %v531 = vsel %vm530, %v418, %v529
  %vm532 = vcmp.eq.f32.partialorder %v418, 0.0
  %v533 = vand.u32 %v418, 2147483648
  %v534 = vsel %vm532, %v533, %v531
  %v535 = vrsqrt.pop %v419
  %v536 = vmul.f32 %v419, %v535
  %vm537 = vcmp.eq.f32.partialorder %v419, inf
  %v538 = vsel %vm537, %v419, %v536
  %vm539 = vcmp.eq.f32.partialorder %v419, 0.0
  %v540 = vand.u32 %v419, 2147483648
  %v541 = vsel %vm539, %v540, %v538
  %v542 = vrsqrt.pop %v420
  %v543 = vmul.f32 %v420, %v542
  %vm544 = vcmp.eq.f32.partialorder %v420, inf
  %v545 = vsel %vm544, %v420, %v543
  %vm546 = vcmp.eq.f32.partialorder %v420, 0.0
  %v547 = vand.u32 %v420, 2147483648
  %v548 = vsel %vm546, %v547, %v545
  %v549 = vsel %vm421, %v443, 0.0
  %v550 = vsel %vm422, %v450, 0.0
  %v551 = vsel %vm423, %v457, 0.0
  %v552 = vsel %vm424, %v464, 0.0
  %v553 = vsel %vm425, %v471, 0.0
  %v554 = vsel %vm426, %v478, 0.0
  %v555 = vsel %vm427, %v485, 0.0
  %v556 = vsel %vm428, %v492, 0.0
  %v557 = vsel %vm429, %v499, 0.0
  %v558 = vsel %vm430, %v506, 0.0
  %v559 = vsel %vm431, %v513, 0.0
  %v560 = vsel %vm432, %v520, 0.0
  %v561 = vsel %vm433, %v527, 0.0
  %v562 = vsel %vm434, %v534, 0.0
  %v563 = vsel %vm435, %v541, 0.0
  %v564 = vsel %vm436, %v548, 0.0
  %v565 = vld [vmem:[%s5] sm:$0xff]
  %v566 = vld [vmem:[%s5 + $0x8] sm:$0xff]
  %v567 = vld [vmem:[%s5 + $0x10] sm:$0xff]
  %v568 = vld [vmem:[%s5 + $0x18] sm:$0xff]
  %v569 = vld [vmem:[%s5 + $0x20] sm:$0xff]
  %v570 = vld [vmem:[%s5 + $0x28] sm:$0xff]
  %v571 = vld [vmem:[%s5 + $0x30] sm:$0xff]
  %v572 = vld [vmem:[%s5 + $0x38] sm:$0xff]
  %v573 = vld [vmem:[%s5 + $0x40] sm:$0xff]
  %v574 = vld [vmem:[%s5 + $0x48] sm:$0xff]
  %v575 = vld [vmem:[%s5 + $0x50] sm:$0xff]
  %v576 = vld [vmem:[%s5 + $0x58] sm:$0xff]
  %v577 = vld [vmem:[%s5 + $0x60] sm:$0xff]
  %v578 = vld [vmem:[%s5 + $0x68] sm:$0xff]
  %v579 = vld [vmem:[%s5 + $0x70] sm:$0xff]
  %v580 = vld [vmem:[%s5 + $0x78] sm:$0xff]
  %v581 = vld [vmem:[%s6] sm:$0x1]
  %582 = vset.pattern.permute.xlu0 0
  %583 = vperm.xlu0 %582, %v565
  %v584 = vpop.permute.xlu0 %583
  %585 = vset.pattern.permute.xlu0 0
  %586 = vperm.xlu0 %585, %v566
  %v587 = vpop.permute.xlu0 %586
  %588 = vset.pattern.permute.xlu0 0
  %589 = vperm.xlu0 %588, %v567
  %v590 = vpop.permute.xlu0 %589
  %591 = vset.pattern.permute.xlu0 0
  %592 = vperm.xlu0 %591, %v568
  %v593 = vpop.permute.xlu0 %592
  %594 = vset.pattern.permute.xlu0 0
  %595 = vperm.xlu0 %594, %v569
  %v596 = vpop.permute.xlu0 %595
  %597 = vset.pattern.permute.xlu0 0
  %598 = vperm.xlu0 %597, %v570
  %v599 = vpop.permute.xlu0 %598
  %600 = vset.pattern.permute.xlu0 0
  %601 = vperm.xlu0 %600, %v571
  %v602 = vpop.permute.xlu0 %601
  %603 = vset.pattern.permute.xlu0 0
  %604 = vperm.xlu0 %603, %v572
  %v605 = vpop.permute.xlu0 %604
  %606 = vset.pattern.permute.xlu0 0
  %607 = vperm.xlu0 %606, %v573
  %v608 = vpop.permute.xlu0 %607
  %609 = vset.pattern.permute.xlu0 0
  %610 = vperm.xlu0 %609, %v574
  %v611 = vpop.permute.xlu0 %610
  %612 = vset.pattern.permute.xlu0 0
  %613 = vperm.xlu0 %612, %v575
  %v614 = vpop.permute.xlu0 %613
  %615 = vset.pattern.permute.xlu0 0
  %616 = vperm.xlu0 %615, %v576
  %v617 = vpop.permute.xlu0 %616
  %618 = vset.pattern.permute.xlu0 0
  %619 = vperm.xlu0 %618, %v577
  %v620 = vpop.permute.xlu0 %619
  %621 = vset.pattern.permute.xlu0 0
  %622 = vperm.xlu0 %621, %v578
  %v623 = vpop.permute.xlu0 %622
  %624 = vset.pattern.permute.xlu0 0
  %625 = vperm.xlu0 %624, %v579
  %v626 = vpop.permute.xlu0 %625
  %627 = vset.pattern.permute.xlu0 0
  %628 = vperm.xlu0 %627, %v580
  %v629 = vpop.permute.xlu0 %628
  %v630 = vlaneseq
  %v631 = vshrl.u32 %v630, 7
  %v632 = vsub.s32 0, %v631
  %v633 = vrot.slane %v581, %v632
  %vm634 = vcmp.eq.s32.totalorder %v584, %v633
  %vm635 = vcmp.eq.s32.totalorder %v587, %v633
  %vm636 = vcmp.eq.s32.totalorder %v590, %v633
  %vm637 = vcmp.eq.s32.totalorder %v593, %v633
  %vm638 = vcmp.eq.s32.totalorder %v596, %v633
  %vm639 = vcmp.eq.s32.totalorder %v599, %v633
  %vm640 = vcmp.eq.s32.totalorder %v602, %v633
  %vm641 = vcmp.eq.s32.totalorder %v605, %v633
  %vm642 = vcmp.eq.s32.totalorder %v608, %v633
  %vm643 = vcmp.eq.s32.totalorder %v611, %v633
  %vm644 = vcmp.eq.s32.totalorder %v614, %v633
  %vm645 = vcmp.eq.s32.totalorder %v617, %v633
  %vm646 = vcmp.eq.s32.totalorder %v620, %v633
  %vm647 = vcmp.eq.s32.totalorder %v623, %v633
  %vm648 = vcmp.eq.s32.totalorder %v626, %v633
  %vm649 = vcmp.eq.s32.totalorder %v629, %v633
  %s650 = smul.u32 0, 128
  %v651 = vlaneseq
  %v652 = vshrl.u32 %v651, 7
  %v653 = vadd.s32 %v652, 8
  %v654 = vadd.s32 %v652, 16
  %v655 = vadd.s32 %v652, 24
  %v656 = vadd.s32 %v652, 32
  %v657 = vadd.s32 %v652, 40
  %v658 = vadd.s32 %v652, 48
  %v659 = vadd.s32 %v652, 56
  %v660 = vadd.s32 %v652, 64
  %v661 = vadd.s32 %v652, 72
  %v662 = vadd.s32 %v652, 80
  %v663 = vadd.s32 %v652, 88
  %v664 = vadd.s32 %v652, 96
  %v665 = vadd.s32 %v652, 104
  %v666 = vadd.s32 %v652, 112
  %v667 = vadd.s32 %v652, 120
  %v668 = vstv %s650
  %v669 = vadd.s32 %v668, %v652
  %v670 = vadd.s32 %v668, %v653
  %v671 = vadd.s32 %v668, %v654
  %v672 = vadd.s32 %v668, %v655
  %v673 = vadd.s32 %v668, %v656
  %v674 = vadd.s32 %v668, %v657
  %v675 = vadd.s32 %v668, %v658
  %v676 = vadd.s32 %v668, %v659
  %v677 = vadd.s32 %v668, %v660
  %v678 = vadd.s32 %v668, %v661
  %v679 = vadd.s32 %v668, %v662
  %v680 = vadd.s32 %v668, %v663
  %v681 = vadd.s32 %v668, %v664
  %v682 = vadd.s32 %v668, %v665
  %v683 = vadd.s32 %v668, %v666
  %v684 = vadd.s32 %v668, %v667
  %v685 = vlaneseq
  %v686 = vand.u32 %v685, 127
  %v687 = vstv %s28
  %vm688 = vcmp.lt.s32.totalorder %v669, %v687
  %vm689 = vcmp.lt.s32.totalorder %v670, %v687
  %vm690 = vcmp.lt.s32.totalorder %v671, %v687
  %vm691 = vcmp.lt.s32.totalorder %v672, %v687
  %vm692 = vcmp.lt.s32.totalorder %v673, %v687
  %vm693 = vcmp.lt.s32.totalorder %v674, %v687
  %vm694 = vcmp.lt.s32.totalorder %v675, %v687
  %vm695 = vcmp.lt.s32.totalorder %v676, %v687
  %vm696 = vcmp.lt.s32.totalorder %v677, %v687
  %vm697 = vcmp.lt.s32.totalorder %v678, %v687
  %vm698 = vcmp.lt.s32.totalorder %v679, %v687
  %vm699 = vcmp.lt.s32.totalorder %v680, %v687
  %vm700 = vcmp.lt.s32.totalorder %v681, %v687
  %vm701 = vcmp.lt.s32.totalorder %v682, %v687
  %vm702 = vcmp.lt.s32.totalorder %v683, %v687
  %vm703 = vcmp.lt.s32.totalorder %v684, %v687
  %vm704 = vcmp.lt.s32.totalorder %v686, %v687
  %vm705 = vcmp.ne.s32.totalorder %v669, %v686
  %vm706 = vcmp.ne.s32.totalorder %v670, %v686
  %vm707 = vcmp.ne.s32.totalorder %v671, %v686
  %vm708 = vcmp.ne.s32.totalorder %v672, %v686
  %vm709 = vcmp.ne.s32.totalorder %v673, %v686
  %vm710 = vcmp.ne.s32.totalorder %v674, %v686
  %vm711 = vcmp.ne.s32.totalorder %v675, %v686
  %vm712 = vcmp.ne.s32.totalorder %v676, %v686
  %vm713 = vcmp.ne.s32.totalorder %v677, %v686
  %vm714 = vcmp.ne.s32.totalorder %v678, %v686
  %vm715 = vcmp.ne.s32.totalorder %v679, %v686
  %vm716 = vcmp.ne.s32.totalorder %v680, %v686
  %vm717 = vcmp.ne.s32.totalorder %v681, %v686
  %vm718 = vcmp.ne.s32.totalorder %v682, %v686
  %vm719 = vcmp.ne.s32.totalorder %v683, %v686
  %vm720 = vcmp.ne.s32.totalorder %v684, %v686
  %vm721 = vmand %vm634, %vm705
  %vm722 = vmand %vm635, %vm706
  %vm723 = vmand %vm636, %vm707
  %vm724 = vmand %vm637, %vm708
  %vm725 = vmand %vm638, %vm709
  %vm726 = vmand %vm639, %vm710
  %vm727 = vmand %vm640, %vm711
  %vm728 = vmand %vm641, %vm712
  %vm729 = vmand %vm642, %vm713
  %vm730 = vmand %vm643, %vm714
  %vm731 = vmand %vm644, %vm715
  %vm732 = vmand %vm645, %vm716
  %vm733 = vmand %vm646, %vm717
  %vm734 = vmand %vm647, %vm718
  %vm735 = vmand %vm648, %vm719
  %vm736 = vmand %vm649, %vm720
  %v737 = vsel %vm704, 1, 0
  %vm738 = vcmp.eq.s32.totalorder %v737, 1
  %vm739 = vmand %vm721, %vm738
  %vm740 = vmand %vm722, %vm738
  %vm741 = vmand %vm723, %vm738
  %vm742 = vmand %vm724, %vm738
  %vm743 = vmand %vm725, %vm738
  %vm744 = vmand %vm726, %vm738
  %vm745 = vmand %vm727, %vm738
  %vm746 = vmand %vm728, %vm738
  %vm747 = vmand %vm729, %vm738
  %vm748 = vmand %vm730, %vm738
  %vm749 = vmand %vm731, %vm738
  %vm750 = vmand %vm732, %vm738
  %vm751 = vmand %vm733, %vm738
  %vm752 = vmand %vm734, %vm738
  %vm753 = vmand %vm735, %vm738
  %vm754 = vmand %vm736, %vm738
  %v755 = vsel %vm739, %v549, 0.0
  %v756 = vsel %vm740, %v550, 0.0
  %v757 = vsel %vm741, %v551, 0.0
  %v758 = vsel %vm742, %v552, 0.0
  %v759 = vsel %vm743, %v553, 0.0
  %v760 = vsel %vm744, %v554, 0.0
  %v761 = vsel %vm745, %v555, 0.0
  %v762 = vsel %vm746, %v556, 0.0
  %v763 = vsel %vm747, %v557, 0.0
  %v764 = vsel %vm748, %v558, 0.0
  %v765 = vsel %vm749, %v559, 0.0
  %v766 = vsel %vm750, %v560, 0.0
  %v767 = vsel %vm751, %v561, 0.0
  %v768 = vsel %vm752, %v562, 0.0
  %v769 = vsel %vm753, %v563, 0.0
  %v770 = vsel %vm754, %v564, 0.0
  %771 = vmax.xlane.f32.xlu0 %v755
  %v772 = vpop.xlane.xlu0 %771
  %773 = vmax.xlane.f32.xlu0 %v756
  %v774 = vpop.xlane.xlu0 %773
  %775 = vmax.xlane.f32.xlu0 %v757
  %v776 = vpop.xlane.xlu0 %775
  %777 = vmax.xlane.f32.xlu0 %v758
  %v778 = vpop.xlane.xlu0 %777
  %779 = vmax.xlane.f32.xlu0 %v759
  %v780 = vpop.xlane.xlu0 %779
  %781 = vmax.xlane.f32.xlu0 %v760
  %v782 = vpop.xlane.xlu0 %781
  %783 = vmax.xlane.f32.xlu0 %v761
  %v784 = vpop.xlane.xlu0 %783
  %785 = vmax.xlane.f32.xlu0 %v762
  %v786 = vpop.xlane.xlu0 %785
  %787 = vmax.xlane.f32.xlu0 %v763
  %v788 = vpop.xlane.xlu0 %787
  %789 = vmax.xlane.f32.xlu0 %v764
  %v790 = vpop.xlane.xlu0 %789
  %791 = vmax.xlane.f32.xlu0 %v765
  %v792 = vpop.xlane.xlu0 %791
  %793 = vmax.xlane.f32.xlu0 %v766
  %v794 = vpop.xlane.xlu0 %793
  %795 = vmax.xlane.f32.xlu0 %v767
  %v796 = vpop.xlane.xlu0 %795
  %797 = vmax.xlane.f32.xlu0 %v768
  %v798 = vpop.xlane.xlu0 %797
  %799 = vmax.xlane.f32.xlu0 %v769
  %v800 = vpop.xlane.xlu0 %799
  %801 = vmax.xlane.f32.xlu0 %v770
  %v802 = vpop.xlane.xlu0 %801
  %v803 = vsel %vm738, %v549, 0.0
  %v804 = vsel %vm738, %v550, 0.0
  %v805 = vsel %vm738, %v551, 0.0
  %v806 = vsel %vm738, %v552, 0.0
  %v807 = vsel %vm738, %v553, 0.0
  %v808 = vsel %vm738, %v554, 0.0
  %v809 = vsel %vm738, %v555, 0.0
  %v810 = vsel %vm738, %v556, 0.0
  %v811 = vsel %vm738, %v557, 0.0
  %v812 = vsel %vm738, %v558, 0.0
  %v813 = vsel %vm738, %v559, 0.0
  %v814 = vsel %vm738, %v560, 0.0
  %v815 = vsel %vm738, %v561, 0.0
  %v816 = vsel %vm738, %v562, 0.0
  %v817 = vsel %vm738, %v563, 0.0
  %v818 = vsel %vm738, %v564, 0.0
  %819 = vmax.xlane.f32.xlu0 %v803
  %v820 = vpop.xlane.xlu0 %819
  %821 = vmax.xlane.f32.xlu0 %v804
  %v822 = vpop.xlane.xlu0 %821
  %823 = vmax.xlane.f32.xlu0 %v805
  %v824 = vpop.xlane.xlu0 %823
  %825 = vmax.xlane.f32.xlu0 %v806
  %v826 = vpop.xlane.xlu0 %825
  %827 = vmax.xlane.f32.xlu0 %v807
  %v828 = vpop.xlane.xlu0 %827
  %829 = vmax.xlane.f32.xlu0 %v808
  %v830 = vpop.xlane.xlu0 %829
  %831 = vmax.xlane.f32.xlu0 %v809
  %v832 = vpop.xlane.xlu0 %831
  %833 = vmax.xlane.f32.xlu0 %v810
  %v834 = vpop.xlane.xlu0 %833
  %835 = vmax.xlane.f32.xlu0 %v811
  %v836 = vpop.xlane.xlu0 %835
  %837 = vmax.xlane.f32.xlu0 %v812
  %v838 = vpop.xlane.xlu0 %837
  %839 = vmax.xlane.f32.xlu0 %v813
  %v840 = vpop.xlane.xlu0 %839
  %841 = vmax.xlane.f32.xlu0 %v814
  %v842 = vpop.xlane.xlu0 %841
  %843 = vmax.xlane.f32.xlu0 %v815
  %v844 = vpop.xlane.xlu0 %843
  %845 = vmax.xlane.f32.xlu0 %v816
  %v846 = vpop.xlane.xlu0 %845
  %847 = vmax.xlane.f32.xlu0 %v817
  %v848 = vpop.xlane.xlu0 %847
  %849 = vmax.xlane.f32.xlu0 %v818
  %v850 = vpop.xlane.xlu0 %849
  %vm851 = vmxor %vm704, 1
  %v852 = vsel %vm851, 1, 0
  %vm853 = vcmp.eq.s32.totalorder %v852, 1
  %vm854 = vmor %vm634, %vm853
  %vm855 = vmor %vm635, %vm853
  %vm856 = vmor %vm636, %vm853
  %vm857 = vmor %vm637, %vm853
  %vm858 = vmor %vm638, %vm853
  %vm859 = vmor %vm639, %vm853
  %vm860 = vmor %vm640, %vm853
  %vm861 = vmor %vm641, %vm853
  %vm862 = vmor %vm642, %vm853
  %vm863 = vmor %vm643, %vm853
  %vm864 = vmor %vm644, %vm853
  %vm865 = vmor %vm645, %vm853
  %vm866 = vmor %vm646, %vm853
  %vm867 = vmor %vm647, %vm853
  %vm868 = vmor %vm648, %vm853
  %vm869 = vmor %vm649, %vm853
  %v870 = vadd.f32 %v549, %v820
  %v871 = vadd.f32 %v550, %v822
  %v872 = vadd.f32 %v551, %v824
  %v873 = vadd.f32 %v552, %v826
  %v874 = vadd.f32 %v553, %v828
  %v875 = vadd.f32 %v554, %v830
  %v876 = vadd.f32 %v555, %v832
  %v877 = vadd.f32 %v556, %v834
  %v878 = vadd.f32 %v557, %v836
  %v879 = vadd.f32 %v558, %v838
  %v880 = vadd.f32 %v559, %v840
  %v881 = vadd.f32 %v560, %v842
  %v882 = vadd.f32 %v561, %v844
  %v883 = vadd.f32 %v562, %v846
  %v884 = vadd.f32 %v563, %v848
  %v885 = vadd.f32 %v564, %v850
  %v886 = vsel %vm854, %v870, %v549
  %v887 = vsel %vm855, %v871, %v550
  %v888 = vsel %vm856, %v872, %v551
  %v889 = vsel %vm857, %v873, %v552
  %v890 = vsel %vm858, %v874, %v553
  %v891 = vsel %vm859, %v875, %v554
  %v892 = vsel %vm860, %v876, %v555
  %v893 = vsel %vm861, %v877, %v556
  %v894 = vsel %vm862, %v878, %v557
  %v895 = vsel %vm863, %v879, %v558
  %v896 = vsel %vm864, %v880, %v559
  %v897 = vsel %vm865, %v881, %v560
  %v898 = vsel %vm866, %v882, %v561
  %v899 = vsel %vm867, %v883, %v562
  %v900 = vsel %vm868, %v884, %v563
  %v901 = vsel %vm869, %v885, %v564
  %902 = vmin.xlane.f32.xlu0 %v886
  %v903 = vpop.xlane.xlu0 %902
  %904 = vmin.xlane.f32.xlu0 %v887
  %v905 = vpop.xlane.xlu0 %904
  %906 = vmin.xlane.f32.xlu0 %v888
  %v907 = vpop.xlane.xlu0 %906
  %908 = vmin.xlane.f32.xlu0 %v889
  %v909 = vpop.xlane.xlu0 %908
  %910 = vmin.xlane.f32.xlu0 %v890
  %v911 = vpop.xlane.xlu0 %910
  %912 = vmin.xlane.f32.xlu0 %v891
  %v913 = vpop.xlane.xlu0 %912
  %914 = vmin.xlane.f32.xlu0 %v892
  %v915 = vpop.xlane.xlu0 %914
  %916 = vmin.xlane.f32.xlu0 %v893
  %v917 = vpop.xlane.xlu0 %916
  %918 = vmin.xlane.f32.xlu0 %v894
  %v919 = vpop.xlane.xlu0 %918
  %920 = vmin.xlane.f32.xlu0 %v895
  %v921 = vpop.xlane.xlu0 %920
  %922 = vmin.xlane.f32.xlu0 %v896
  %v923 = vpop.xlane.xlu0 %922
  %924 = vmin.xlane.f32.xlu0 %v897
  %v925 = vpop.xlane.xlu0 %924
  %926 = vmin.xlane.f32.xlu0 %v898
  %v927 = vpop.xlane.xlu0 %926
  %928 = vmin.xlane.f32.xlu0 %v899
  %v929 = vpop.xlane.xlu0 %928
  %930 = vmin.xlane.f32.xlu0 %v900
  %v931 = vpop.xlane.xlu0 %930
  %932 = vmin.xlane.f32.xlu0 %v901
  %v933 = vpop.xlane.xlu0 %932
  %v934 = vsub.f32 %v772, %v903
  %v935 = vsub.f32 %v774, %v905
  %v936 = vsub.f32 %v776, %v907
  %v937 = vsub.f32 %v778, %v909
  %v938 = vsub.f32 %v780, %v911
  %v939 = vsub.f32 %v782, %v913
  %v940 = vsub.f32 %v784, %v915
  %v941 = vsub.f32 %v786, %v917
  %v942 = vsub.f32 %v788, %v919
  %v943 = vsub.f32 %v790, %v921
  %v944 = vsub.f32 %v792, %v923
  %v945 = vsub.f32 %v794, %v925
  %v946 = vsub.f32 %v796, %v927
  %v947 = vsub.f32 %v798, %v929
  %v948 = vsub.f32 %v800, %v931
  %v949 = vsub.f32 %v802, %v933
  %v950 = vmax.f32 %v934, 0.0
  %v951 = vmax.f32 %v935, 0.0
  %v952 = vmax.f32 %v936, 0.0
  %v953 = vmax.f32 %v937, 0.0
  %v954 = vmax.f32 %v938, 0.0
  %v955 = vmax.f32 %v939, 0.0
  %v956 = vmax.f32 %v940, 0.0
  %v957 = vmax.f32 %v941, 0.0
  %v958 = vmax.f32 %v942, 0.0
  %v959 = vmax.f32 %v943, 0.0
  %v960 = vmax.f32 %v944, 0.0
  %v961 = vmax.f32 %v945, 0.0
  %v962 = vmax.f32 %v946, 0.0
  %v963 = vmax.f32 %v947, 0.0
  %v964 = vmax.f32 %v948, 0.0
  %v965 = vmax.f32 %v949, 0.0
  %v966 = vand.u32 2147483647, %v934
  %v967 = vand.u32 2147483647, %v935
  %v968 = vand.u32 2147483647, %v936
  %v969 = vand.u32 2147483647, %v937
  %v970 = vand.u32 2147483647, %v938
  %v971 = vand.u32 2147483647, %v939
  %v972 = vand.u32 2147483647, %v940
  %v973 = vand.u32 2147483647, %v941
  %v974 = vand.u32 2147483647, %v942
  %v975 = vand.u32 2147483647, %v943
  %v976 = vand.u32 2147483647, %v944
  %v977 = vand.u32 2147483647, %v945
  %v978 = vand.u32 2147483647, %v946
  %v979 = vand.u32 2147483647, %v947
  %v980 = vand.u32 2147483647, %v948
  %v981 = vand.u32 2147483647, %v949
  %v982 = vsub.f32 0.0, %v966
  %v983 = vsub.f32 0.0, %v967
  %v984 = vsub.f32 0.0, %v968
  %v985 = vsub.f32 0.0, %v969
  %v986 = vsub.f32 0.0, %v970
  %v987 = vsub.f32 0.0, %v971
  %v988 = vsub.f32 0.0, %v972
  %v989 = vsub.f32 0.0, %v973
  %v990 = vsub.f32 0.0, %v974
  %v991 = vsub.f32 0.0, %v975
  %v992 = vsub.f32 0.0, %v976
  %v993 = vsub.f32 0.0, %v977
  %v994 = vsub.f32 0.0, %v978
  %v995 = vsub.f32 0.0, %v979
  %v996 = vsub.f32 0.0, %v980
  %v997 = vsub.f32 0.0, %v981
  %v998 = vmul.f32 %v982, 1.442695
  %v999 = vpow.pop %v998
  %v1000 = vmul.f32 %v983, 1.442695
  %v1001 = vpow.pop %v1000
  %v1002 = vmul.f32 %v984, 1.442695
  %v1003 = vpow.pop %v1002
  %v1004 = vmul.f32 %v985, 1.442695
  %v1005 = vpow.pop %v1004
  %v1006 = vmul.f32 %v986, 1.442695
  %v1007 = vpow.pop %v1006
  %v1008 = vmul.f32 %v987, 1.442695
  %v1009 = vpow.pop %v1008
  %v1010 = vmul.f32 %v988, 1.442695
  %v1011 = vpow.pop %v1010
  %v1012 = vmul.f32 %v989, 1.442695
  %v1013 = vpow.pop %v1012
  %v1014 = vmul.f32 %v990, 1.442695
  %v1015 = vpow.pop %v1014
  %v1016 = vmul.f32 %v991, 1.442695
  %v1017 = vpow.pop %v1016
  %v1018 = vmul.f32 %v992, 1.442695
  %v1019 = vpow.pop %v1018
  %v1020 = vmul.f32 %v993, 1.442695
  %v1021 = vpow.pop %v1020
  %v1022 = vmul.f32 %v994, 1.442695
  %v1023 = vpow.pop %v1022
  %v1024 = vmul.f32 %v995, 1.442695
  %v1025 = vpow.pop %v1024
  %v1026 = vmul.f32 %v996, 1.442695
  %v1027 = vpow.pop %v1026
  %v1028 = vmul.f32 %v997, 1.442695
  %v1029 = vpow.pop %v1028
  %v1030 = vadd.f32 %v999, 1.0
  %v1031 = vlog2.pop %v1030
  %v1032 = vmul.f32 %v1031, 0.6931472
  %v1033 = vmul.f32 -0.5, %v999
  %v1034 = vadd.f32 %v1033, 1.0
  %v1035 = vmul.f32 %v1034, %v999
  %v1036 = vand.u32 2147483647, %v999
  %vm1037 = vcmp.lt.f32.partialorder %v1036, 0.0004427343
  %v1038 = vsel %vm1037, %v1035, %v1032
  %v1039 = vadd.f32 %v1001, 1.0
  %v1040 = vlog2.pop %v1039
  %v1041 = vmul.f32 %v1040, 0.6931472
  %v1042 = vmul.f32 -0.5, %v1001
  %v1043 = vadd.f32 %v1042, 1.0
  %v1044 = vmul.f32 %v1043, %v1001
  %v1045 = vand.u32 2147483647, %v1001
  %vm1046 = vcmp.lt.f32.partialorder %v1045, 0.0004427343
  %v1047 = vsel %vm1046, %v1044, %v1041
  %v1048 = vadd.f32 %v1003, 1.0
  %v1049 = vlog2.pop %v1048
  %v1050 = vmul.f32 %v1049, 0.6931472
  %v1051 = vmul.f32 -0.5, %v1003
  %v1052 = vadd.f32 %v1051, 1.0
  %v1053 = vmul.f32 %v1052, %v1003
  %v1054 = vand.u32 2147483647, %v1003
  %vm1055 = vcmp.lt.f32.partialorder %v1054, 0.0004427343
  %v1056 = vsel %vm1055, %v1053, %v1050
  %v1057 = vadd.f32 %v1005, 1.0
  %v1058 = vlog2.pop %v1057
  %v1059 = vmul.f32 %v1058, 0.6931472
  %v1060 = vmul.f32 -0.5, %v1005
  %v1061 = vadd.f32 %v1060, 1.0
  %v1062 = vmul.f32 %v1061, %v1005
  %v1063 = vand.u32 2147483647, %v1005
  %vm1064 = vcmp.lt.f32.partialorder %v1063, 0.0004427343
  %v1065 = vsel %vm1064, %v1062, %v1059
  %v1066 = vadd.f32 %v1007, 1.0
  %v1067 = vlog2.pop %v1066
  %v1068 = vmul.f32 %v1067, 0.6931472
  %v1069 = vmul.f32 -0.5, %v1007
  %v1070 = vadd.f32 %v1069, 1.0
  %v1071 = vmul.f32 %v1070, %v1007
  %v1072 = vand.u32 2147483647, %v1007
  %vm1073 = vcmp.lt.f32.partialorder %v1072, 0.0004427343
  %v1074 = vsel %vm1073, %v1071, %v1068
  %v1075 = vadd.f32 %v1009, 1.0
  %v1076 = vlog2.pop %v1075
  %v1077 = vmul.f32 %v1076, 0.6931472
  %v1078 = vmul.f32 -0.5, %v1009
  %v1079 = vadd.f32 %v1078, 1.0
  %v1080 = vmul.f32 %v1079, %v1009
  %v1081 = vand.u32 2147483647, %v1009
  %vm1082 = vcmp.lt.f32.partialorder %v1081, 0.0004427343
  %v1083 = vsel %vm1082, %v1080, %v1077
  %v1084 = vadd.f32 %v1011, 1.0
  %v1085 = vlog2.pop %v1084
  %v1086 = vmul.f32 %v1085, 0.6931472
  %v1087 = vmul.f32 -0.5, %v1011
  %v1088 = vadd.f32 %v1087, 1.0
  %v1089 = vmul.f32 %v1088, %v1011
  %v1090 = vand.u32 2147483647, %v1011
  %vm1091 = vcmp.lt.f32.partialorder %v1090, 0.0004427343
  %v1092 = vsel %vm1091, %v1089, %v1086
  %v1093 = vadd.f32 %v1013, 1.0
  %v1094 = vlog2.pop %v1093
  %v1095 = vmul.f32 %v1094, 0.6931472
  %v1096 = vmul.f32 -0.5, %v1013
  %v1097 = vadd.f32 %v1096, 1.0
  %v1098 = vmul.f32 %v1097, %v1013
  %v1099 = vand.u32 2147483647, %v1013
  %vm1100 = vcmp.lt.f32.partialorder %v1099, 0.0004427343
  %v1101 = vsel %vm1100, %v1098, %v1095
  %v1102 = vadd.f32 %v1015, 1.0
  %v1103 = vlog2.pop %v1102
  %v1104 = vmul.f32 %v1103, 0.6931472
  %v1105 = vmul.f32 -0.5, %v1015
  %v1106 = vadd.f32 %v1105, 1.0
  %v1107 = vmul.f32 %v1106, %v1015
  %v1108 = vand.u32 2147483647, %v1015
  %vm1109 = vcmp.lt.f32.partialorder %v1108, 0.0004427343
  %v1110 = vsel %vm1109, %v1107, %v1104
  %v1111 = vadd.f32 %v1017, 1.0
  %v1112 = vlog2.pop %v1111
  %v1113 = vmul.f32 %v1112, 0.6931472
  %v1114 = vmul.f32 -0.5, %v1017
  %v1115 = vadd.f32 %v1114, 1.0
  %v1116 = vmul.f32 %v1115, %v1017
  %v1117 = vand.u32 2147483647, %v1017
  %vm1118 = vcmp.lt.f32.partialorder %v1117, 0.0004427343
  %v1119 = vsel %vm1118, %v1116, %v1113
  %v1120 = vadd.f32 %v1019, 1.0
  %v1121 = vlog2.pop %v1120
  %v1122 = vmul.f32 %v1121, 0.6931472
  %v1123 = vmul.f32 -0.5, %v1019
  %v1124 = vadd.f32 %v1123, 1.0
  %v1125 = vmul.f32 %v1124, %v1019
  %v1126 = vand.u32 2147483647, %v1019
  %vm1127 = vcmp.lt.f32.partialorder %v1126, 0.0004427343
  %v1128 = vsel %vm1127, %v1125, %v1122
  %v1129 = vadd.f32 %v1021, 1.0
  %v1130 = vlog2.pop %v1129
  %v1131 = vmul.f32 %v1130, 0.6931472
  %v1132 = vmul.f32 -0.5, %v1021
  %v1133 = vadd.f32 %v1132, 1.0
  %v1134 = vmul.f32 %v1133, %v1021
  %v1135 = vand.u32 2147483647, %v1021
  %vm1136 = vcmp.lt.f32.partialorder %v1135, 0.0004427343
  %v1137 = vsel %vm1136, %v1134, %v1131
  %v1138 = vadd.f32 %v1023, 1.0
  %v1139 = vlog2.pop %v1138
  %v1140 = vmul.f32 %v1139, 0.6931472
  %v1141 = vmul.f32 -0.5, %v1023
  %v1142 = vadd.f32 %v1141, 1.0
  %v1143 = vmul.f32 %v1142, %v1023
  %v1144 = vand.u32 2147483647, %v1023
  %vm1145 = vcmp.lt.f32.partialorder %v1144, 0.0004427343
  %v1146 = vsel %vm1145, %v1143, %v1140
  %v1147 = vadd.f32 %v1025, 1.0
  %v1148 = vlog2.pop %v1147
  %v1149 = vmul.f32 %v1148, 0.6931472
  %v1150 = vmul.f32 -0.5, %v1025
  %v1151 = vadd.f32 %v1150, 1.0
  %v1152 = vmul.f32 %v1151, %v1025
  %v1153 = vand.u32 2147483647, %v1025
  %vm1154 = vcmp.lt.f32.partialorder %v1153, 0.0004427343
  %v1155 = vsel %vm1154, %v1152, %v1149
  %v1156 = vadd.f32 %v1027, 1.0
  %v1157 = vlog2.pop %v1156
  %v1158 = vmul.f32 %v1157, 0.6931472
  %v1159 = vmul.f32 -0.5, %v1027
  %v1160 = vadd.f32 %v1159, 1.0
  %v1161 = vmul.f32 %v1160, %v1027
  %v1162 = vand.u32 2147483647, %v1027
  %vm1163 = vcmp.lt.f32.partialorder %v1162, 0.0004427343
  %v1164 = vsel %vm1163, %v1161, %v1158
  %v1165 = vadd.f32 %v1029, 1.0
  %v1166 = vlog2.pop %v1165
  %v1167 = vmul.f32 %v1166, 0.6931472
  %v1168 = vmul.f32 -0.5, %v1029
  %v1169 = vadd.f32 %v1168, 1.0
  %v1170 = vmul.f32 %v1169, %v1029
  %v1171 = vand.u32 2147483647, %v1029
  %vm1172 = vcmp.lt.f32.partialorder %v1171, 0.0004427343
  %v1173 = vsel %vm1172, %v1170, %v1167
  %v1174 = vadd.f32 %v950, %v1038
  %v1175 = vadd.f32 %v951, %v1047
  %v1176 = vadd.f32 %v952, %v1056
  %v1177 = vadd.f32 %v953, %v1065
  %v1178 = vadd.f32 %v954, %v1074
  %v1179 = vadd.f32 %v955, %v1083
  %v1180 = vadd.f32 %v956, %v1092
  %v1181 = vadd.f32 %v957, %v1101
  %v1182 = vadd.f32 %v958, %v1110
  %v1183 = vadd.f32 %v959, %v1119
  %v1184 = vadd.f32 %v960, %v1128
  %v1185 = vadd.f32 %v961, %v1137
  %v1186 = vadd.f32 %v962, %v1146
  %v1187 = vadd.f32 %v963, %v1155
  %v1188 = vadd.f32 %v964, %v1164
  %v1189 = vadd.f32 %v965, %v1173
  %v1190 = vsel %vm688, %v1174, 0.0
  %v1191 = vsel %vm689, %v1175, 0.0
  %v1192 = vsel %vm690, %v1176, 0.0
  %v1193 = vsel %vm691, %v1177, 0.0
  %v1194 = vsel %vm692, %v1178, 0.0
  %v1195 = vsel %vm693, %v1179, 0.0
  %v1196 = vsel %vm694, %v1180, 0.0
  %v1197 = vsel %vm695, %v1181, 0.0
  %v1198 = vsel %vm696, %v1182, 0.0
  %v1199 = vsel %vm697, %v1183, 0.0
  %v1200 = vsel %vm698, %v1184, 0.0
  %v1201 = vsel %vm699, %v1185, 0.0
  %v1202 = vsel %vm700, %v1186, 0.0
  %v1203 = vsel %vm701, %v1187, 0.0
  %v1204 = vsel %vm702, %v1188, 0.0
  %v1205 = vsel %vm703, %v1189, 0.0
  %vm1206 = vcmask 7168
  %1207 = vst.msk [vmem:[%s7] sm:$0xff] %vm1206, %v1190
  %1208 = vst.msk [vmem:[%s7 + $0x8] sm:$0xff] %vm1206, %v1191
  %1209 = vst.msk [vmem:[%s7 + $0x10] sm:$0xff] %vm1206, %v1192
  %1210 = vst.msk [vmem:[%s7 + $0x18] sm:$0xff] %vm1206, %v1193
  %1211 = vst.msk [vmem:[%s7 + $0x20] sm:$0xff] %vm1206, %v1194
  %1212 = vst.msk [vmem:[%s7 + $0x28] sm:$0xff] %vm1206, %v1195
  %1213 = vst.msk [vmem:[%s7 + $0x30] sm:$0xff] %vm1206, %v1196
  %1214 = vst.msk [vmem:[%s7 + $0x38] sm:$0xff] %vm1206, %v1197
  %1215 = vst.msk [vmem:[%s7 + $0x40] sm:$0xff] %vm1206, %v1198
  %1216 = vst.msk [vmem:[%s7 + $0x48] sm:$0xff] %vm1206, %v1199
  %1217 = vst.msk [vmem:[%s7 + $0x50] sm:$0xff] %vm1206, %v1200
  %1218 = vst.msk [vmem:[%s7 + $0x58] sm:$0xff] %vm1206, %v1201
  %1219 = vst.msk [vmem:[%s7 + $0x60] sm:$0xff] %vm1206, %v1202
  %1220 = vst.msk [vmem:[%s7 + $0x68] sm:$0xff] %vm1206, %v1203
  %1221 = vst.msk [vmem:[%s7 + $0x70] sm:$0xff] %vm1206, %v1204
  %1222 = vst.msk [vmem:[%s7 + $0x78] sm:$0xff] %vm1206, %v1205
  // Predicated region
  $region30: #{hard_soft_margin_triplet_loss.1} parent=0 // pred_check
    _
  $region31: #{hard_soft_margin_triplet_loss.1} parent=0 // pred_check_branch
    %1224 = sbr.rel (0) target = $region33
  $region32: #{hard_soft_margin_triplet_loss.1} parent=0 // pred_region
    _
  $region33: #{hard_soft_margin_triplet_loss.1} parent=0 // pred_fallthru
    _
  // Predicated region
  $region34: #{hard_soft_margin_triplet_loss.1} parent=0 // pred_check
    _
  $region35: #{hard_soft_margin_triplet_loss.1} parent=0 // pred_check_branch
    %1226 = sbr.rel (0) target = $region37
  $region36: #{hard_soft_margin_triplet_loss.1} parent=0 // pred_region
    _
  $region37: #{hard_soft_margin_triplet_loss.1} parent=0 // pred_fallthru
    _

</llo_original>
